<compile_context>
chip_gen: v7x
topology: tpu7x:2x2x1
jax: 0.10.0
libtpu: 0.0.40
codegen_flags: <defaults>
</compile_context>

<pallas_src>
import math

import jax
import jax.numpy as jnp
from jax.experimental import pallas as pl
from jax.experimental.pallas import tpu as pltpu

LANE = 128


def _round_up(x, m):
    return ((x + m - 1) // m) * m


def dqn_kernel(x_ref,
               w1_ref, b1_ref,
               w2_ref, b2_ref,
               w3_ref, b3_ref,
               w4_ref, b4_ref,
               o_ref):
    """relu(relu(relu(x@W1+b1)@W2+b2)@W3+b3)@W4+b4 on one batch tile.

    x/weights: bf16 (MXU inputs), biases: f32 (1, out), accumulation: f32.
    """
    x = x_ref[...]

    h = jnp.dot(x, w1_ref[...], preferred_element_type=jnp.float32) + b1_ref[...]
    h = jnp.maximum(h, 0.0).astype(jnp.bfloat16)

    h = jnp.dot(h, w2_ref[...], preferred_element_type=jnp.float32) + b2_ref[...]
    h = jnp.maximum(h, 0.0).astype(jnp.bfloat16)

    h = jnp.dot(h, w3_ref[...], preferred_element_type=jnp.float32) + b3_ref[...]
    h = jnp.maximum(h, 0.0).astype(jnp.bfloat16)

    out = jnp.dot(h, w4_ref[...], preferred_element_type=jnp.float32) + b4_ref[...]
    o_ref[...] = out.astype(o_ref.dtype)


def prepare_params(params):
    """One-time pad/cast of the weights (hoisted out of the per-step forward).

    Only the hidden dim (VMEM-resident, never an HBM activation stream) is
    lane-padded; obs (layer1 K) and actions (layer4 N) stay narrow and Mosaic
    masks the non-128 matmul dims.
    """
    (w1, b1), (w2, b2), (w3, b3), (w4, b4) = params
    n_hidden = w2.shape[1]
    hid_p = _round_up(n_hidden, LANE)

    def pad2(a, rows, cols):
        return jnp.pad(a, ((0, rows - a.shape[0]), (0, cols - a.shape[1])))

    w1_p = w1.astype(jnp.bfloat16)                      # (n_obs, 128)
    w2_p = pad2(w2, 128, hid_p).astype(jnp.bfloat16)    # (128, hid_p)
    w3_p = pad2(w3, hid_p, 128).astype(jnp.bfloat16)    # (hid_p, 128)
    w4_p = w4.astype(jnp.bfloat16)                      # (128, n_actions)
    b1_p = b1.astype(jnp.float32)                       # (1, 128)
    b2_p = pad2(b2, 1, hid_p).astype(jnp.float32)       # (1, hid_p)
    b3_p = b3.astype(jnp.float32)                       # (1, 128)
    b4_p = b4.astype(jnp.float32)                       # (1, n_actions)
    return (w1_p, b1_p, w2_p, b2_p, w3_p, b3_p, w4_p, b4_p)


def dqn_forward(x, prepared, *, block_batch=2048):
    """x: (B, n_observations) float32; prepared: output of prepare_params()."""
    w1_p, b1_p, w2_p, b2_p, w3_p, b3_p, w4_p, b4_p = prepared
    batch, n_obs = x.shape
    assert w1_p.shape[0] == n_obs
    hid_p = w2_p.shape[1]
    n_actions = w4_p.shape[1]

    # Batch tile selection:
    #   * large batches: big tiles (amortize ~600-cycle grid-step overhead)
    #   * 16 <= B < 2*block_batch: force exactly 2 tiles so both v7x TCs work
    #   * tiny batches: single minimal tile
    if batch >= 2 * block_batch:
        tb = block_batch
    elif batch >= 16:
        tb = _round_up((_round_up(batch, 8) + 1) // 2, 8)
    else:
        tb = _round_up(batch, 8)
    batch_p = _round_up(batch, tb)
    grid = (batch_p // tb,)

    # Only batch rows are zero-padded; obs stays narrow (no 16x inflated slab).
    x_p = jnp.pad(x, ((0, batch_p - batch), (0, 0))).astype(jnp.bfloat16)

    # Weights/biases: constant index_map -> DMA'd once, VMEM-resident.
    resident = lambda a: pl.BlockSpec(a.shape, lambda i: (0,) * a.ndim)

    flops = 2 * batch_p * (n_obs * 128 + 128 * hid_p + hid_p * 128
                           + 128 * n_actions)
    weight_bytes = sum(int(a.size) * a.dtype.itemsize
                       for a in (w1_p, b1_p, w2_p, b2_p, w3_p, b3_p, w4_p, b4_p))
    bytes_accessed = int(x_p.size) * 2 + batch_p * n_actions * 4 + weight_bytes

    out = pl.pallas_call(
        dqn_kernel,
        out_shape=jax.ShapeDtypeStruct((batch_p, n_actions), jnp.float32),
        grid=grid,
        in_specs=[pl.BlockSpec((tb, n_obs), lambda i: (i, 0)),
                  resident(w1_p), resident(b1_p),
                  resident(w2_p), resident(b2_p),
                  resident(w3_p), resident(b3_p),
                  resident(w4_p), resident(b4_p)],
        out_specs=pl.BlockSpec((tb, n_actions), lambda i: (i, 0)),
        compiler_params=pltpu.CompilerParams(
            dimension_semantics=("parallel",),
            vmem_limit_bytes=32 << 20),
        cost_estimate=pl.CostEstimate(flops=flops, transcendentals=0,
                                      bytes_accessed=bytes_accessed),
    )(x_p, w1_p, b1_p, w2_p, b2_p, w3_p, b3_p, w4_p, b4_p)

    # Only padded batch rows to drop; feature dim is already exact.
    return out[:batch, :]


def init_linear(key, fan_in, fan_out):
    """PyTorch nn.Linear default init (uniform +/- 1/sqrt(fan_in)), stored (in, out)."""
    kw, kb = jax.random.split(key)
    bound = 1.0 / math.sqrt(fan_in)
    w = jax.random.uniform(kw, (fan_in, fan_out), jnp.float32, -bound, bound)
    b = jax.random.uniform(kb, (1, fan_out), jnp.float32, -bound, bound)
    return w, b


def make_params(key, n_observations, n_actions, n_hidden):
    k1, k2, k3, k4 = jax.random.split(key, 4)
    return [
        init_linear(k1, n_observations, 128),
        init_linear(k2, 128, n_hidden),
        init_linear(k3, n_hidden, 128),
        init_linear(k4, 128, n_actions),
    ]


def reference_forward(x, params):
    """Plain-JAX reference emulating the kernel's bf16 MXU inputs / f32 accumulation."""
    (w1, b1), (w2, b2), (w3, b3), (w4, b4) = params
    f = lambda a: a.astype(jnp.bfloat16).astype(jnp.float32)
    h = jnp.maximum(f(x) @ f(w1) + b1, 0.0)
    h = jnp.maximum(f(h) @ f(w2) + b2, 0.0)
    h = jnp.maximum(f(h) @ f(w3) + b3, 0.0)
    return f(h) @ f(w4) + b4


if __name__ == "__main__":
    key = jax.random.PRNGKey(0)
    k_params, k_x = jax.random.split(key)

    # Small shapes consistent with the module's forward pass.
    batch = 2
    n_observations = 8
    n_actions = 4
    n_hidden = 32

    params = make_params(k_params, n_observations, n_actions, n_hidden)
    x = jax.random.normal(k_x, (batch, n_observations), jnp.float32)

    prepared = prepare_params(params)   # one-time pad/cast, reused every call
    fwd = jax.jit(dqn_forward)

    out = fwd(x, prepared)
    out = jax.block_until_ready(out)

    ref = reference_forward(x, params)
    assert out.shape == (batch, n_actions)
    assert jnp.allclose(out, ref, atol=1e-4, rtol=1e-4), \
        f"max abs err {jnp.max(jnp.abs(out - ref))}"

    print("KERNEL_OK")
</pallas_src>

<mosaic_0001>
module attributes {stable_mosaic.version = 11 : i64} {
  func.func @dqn_kernel(%arg0: i32, %arg1: memref<8x8xbf16, #tpu.memory_space<vmem>>, %arg2: memref<8x128xbf16, #tpu.memory_space<vmem>>, %arg3: memref<1x128xf32, #tpu.memory_space<vmem>>, %arg4: memref<128x128xbf16, #tpu.memory_space<vmem>>, %arg5: memref<1x128xf32, #tpu.memory_space<vmem>>, %arg6: memref<128x128xbf16, #tpu.memory_space<vmem>>, %arg7: memref<1x128xf32, #tpu.memory_space<vmem>>, %arg8: memref<128x4xbf16, #tpu.memory_space<vmem>>, %arg9: memref<1x4xf32, #tpu.memory_space<vmem>>, %arg10: memref<8x4xf32, #tpu.memory_space<vmem>>) attributes {dimension_semantics = [#tpu.dimension_semantics<parallel>], iteration_bounds = array<i64: 1>, scalar_prefetch = 0 : i64, scratch_operands = 0 : i64, tpu.core_type = #tpu.core_type<tc>, window_params = [{transform_indices = @transform_0, window_bounds = array<i64: 8, 8>}, {pipeline_mode = #tpu.pipeline_mode<synchronous>, transform_indices = @transform_1, window_bounds = array<i64: 8, 128>}, {pipeline_mode = #tpu.pipeline_mode<synchronous>, transform_indices = @transform_2, window_bounds = array<i64: 1, 128>}, {pipeline_mode = #tpu.pipeline_mode<synchronous>, transform_indices = @transform_3, window_bounds = array<i64: 128, 128>}, {pipeline_mode = #tpu.pipeline_mode<synchronous>, transform_indices = @transform_4, window_bounds = array<i64: 1, 128>}, {pipeline_mode = #tpu.pipeline_mode<synchronous>, transform_indices = @transform_5, window_bounds = array<i64: 128, 128>}, {pipeline_mode = #tpu.pipeline_mode<synchronous>, transform_indices = @transform_6, window_bounds = array<i64: 1, 128>}, {pipeline_mode = #tpu.pipeline_mode<synchronous>, transform_indices = @transform_7, window_bounds = array<i64: 128, 4>}, {pipeline_mode = #tpu.pipeline_mode<synchronous>, transform_indices = @transform_8, window_bounds = array<i64: 1, 4>}, {transform_indices = @transform_9, window_bounds = array<i64: 8, 4>}]} {
    %c0 = arith.constant 0 : index
    %c0_0 = arith.constant 0 : index
    %0 = vector.load %arg1[%c0, %c0_0] : memref<8x8xbf16, #tpu.memory_space<vmem>>, vector<8x8xbf16>
    %c0_1 = arith.constant 0 : index
    %c0_2 = arith.constant 0 : index
    %1 = vector.load %arg2[%c0_1, %c0_2] : memref<8x128xbf16, #tpu.memory_space<vmem>>, vector<8x128xbf16>
    %cst = arith.constant dense<0.000000e+00> : vector<8x128xf32>
    %2 = tpu.matmul %0, %1, %cst {dimension_numbers = #tpu.dot_dimension_numbers<[1], [0], [0], [1], [0, 0, 1, 1], [], []>} : vector<8x8xbf16>, vector<8x128xbf16>, vector<8x128xf32> -> vector<8x128xf32>
    %c0_3 = arith.constant 0 : index
    %c0_4 = arith.constant 0 : index
    %3 = vector.load %arg3[%c0_3, %c0_4] : memref<1x128xf32, #tpu.memory_space<vmem>>, vector<1x128xf32>
    %4 = vector.broadcast %3 : vector<1x128xf32> to vector<8x128xf32>
    %5 = arith.addf %2, %4 : vector<8x128xf32>
    %cst_5 = arith.constant 0.000000e+00 : f32
    %6 = vector.broadcast %cst_5 : f32 to vector<8x128xf32>
    %7 = arith.maximumf %5, %6 : vector<8x128xf32>
    %8 = arith.truncf %7 : vector<8x128xf32> to vector<8x128xbf16>
    %c0_6 = arith.constant 0 : index
    %c0_7 = arith.constant 0 : index
    %9 = vector.load %arg4[%c0_6, %c0_7] : memref<128x128xbf16, #tpu.memory_space<vmem>>, vector<128x128xbf16>
    %cst_8 = arith.constant dense<0.000000e+00> : vector<8x128xf32>
    %10 = tpu.matmul %8, %9, %cst_8 {dimension_numbers = #tpu.dot_dimension_numbers<[1], [0], [0], [1], [0, 0, 1, 1], [], []>} : vector<8x128xbf16>, vector<128x128xbf16>, vector<8x128xf32> -> vector<8x128xf32>
    %c0_9 = arith.constant 0 : index
    %c0_10 = arith.constant 0 : index
    %11 = vector.load %arg5[%c0_9, %c0_10] : memref<1x128xf32, #tpu.memory_space<vmem>>, vector<1x128xf32>
    %12 = vector.broadcast %11 : vector<1x128xf32> to vector<8x128xf32>
    %13 = arith.addf %10, %12 : vector<8x128xf32>
    %cst_11 = arith.constant 0.000000e+00 : f32
    %14 = vector.broadcast %cst_11 : f32 to vector<8x128xf32>
    %15 = arith.maximumf %13, %14 : vector<8x128xf32>
    %16 = arith.truncf %15 : vector<8x128xf32> to vector<8x128xbf16>
    %c0_12 = arith.constant 0 : index
    %c0_13 = arith.constant 0 : index
    %17 = vector.load %arg6[%c0_12, %c0_13] : memref<128x128xbf16, #tpu.memory_space<vmem>>, vector<128x128xbf16>
    %cst_14 = arith.constant dense<0.000000e+00> : vector<8x128xf32>
    %18 = tpu.matmul %16, %17, %cst_14 {dimension_numbers = #tpu.dot_dimension_numbers<[1], [0], [0], [1], [0, 0, 1, 1], [], []>} : vector<8x128xbf16>, vector<128x128xbf16>, vector<8x128xf32> -> vector<8x128xf32>
    %c0_15 = arith.constant 0 : index
    %c0_16 = arith.constant 0 : index
    %19 = vector.load %arg7[%c0_15, %c0_16] : memref<1x128xf32, #tpu.memory_space<vmem>>, vector<1x128xf32>
    %20 = vector.broadcast %19 : vector<1x128xf32> to vector<8x128xf32>
    %21 = arith.addf %18, %20 : vector<8x128xf32>
    %cst_17 = arith.constant 0.000000e+00 : f32
    %22 = vector.broadcast %cst_17 : f32 to vector<8x128xf32>
    %23 = arith.maximumf %21, %22 : vector<8x128xf32>
    %24 = arith.truncf %23 : vector<8x128xf32> to vector<8x128xbf16>
    %c0_18 = arith.constant 0 : index
    %c0_19 = arith.constant 0 : index
    %25 = vector.load %arg8[%c0_18, %c0_19] : memref<128x4xbf16, #tpu.memory_space<vmem>>, vector<128x4xbf16>
    %cst_20 = arith.constant dense<0.000000e+00> : vector<8x4xf32>
    %26 = tpu.matmul %24, %25, %cst_20 {dimension_numbers = #tpu.dot_dimension_numbers<[1], [0], [0], [1], [0, 0, 1, 1], [], []>} : vector<8x128xbf16>, vector<128x4xbf16>, vector<8x4xf32> -> vector<8x4xf32>
    %c0_21 = arith.constant 0 : index
    %c0_22 = arith.constant 0 : index
    %27 = vector.load %arg9[%c0_21, %c0_22] : memref<1x4xf32, #tpu.memory_space<vmem>>, vector<1x4xf32>
    %28 = vector.broadcast %27 : vector<1x4xf32> to vector<8x4xf32>
    %29 = arith.addf %26, %28 : vector<8x4xf32>
    %c0_23 = arith.constant 0 : index
    %c0_24 = arith.constant 0 : index
    %30 = vector.load %arg10[%c0_23, %c0_24] : memref<8x4xf32, #tpu.memory_space<vmem>>, vector<8x4xf32>
    tpu.vector_store %arg10[%c0_23, %c0_24], %29 {strides = array<i32>} : memref<8x4xf32, #tpu.memory_space<vmem>>, vector<8x4xf32>,
    return
  }
  func.func @transform_0(%arg0: i32) -> (i32, i32) {
    %c0_i32 = arith.constant 0 : i32
    %c0_i32_0 = arith.constant 0 : i32
    return %arg0, %c0_i32 : i32, i32
  }
  func.func @transform_1(%arg0: i32) -> (i32, i32) {
    %c0_i32 = arith.constant 0 : i32
    %c0_i32_0 = arith.constant 0 : i32
    %c0_i32_1 = arith.constant 0 : i32
    return %c0_i32, %c0_i32_0 : i32, i32
  }
  func.func @transform_2(%arg0: i32) -> (i32, i32) {
    %c0_i32 = arith.constant 0 : i32
    %c0_i32_0 = arith.constant 0 : i32
    %c0_i32_1 = arith.constant 0 : i32
    return %c0_i32, %c0_i32_0 : i32, i32
  }
  func.func @transform_3(%arg0: i32) -> (i32, i32) {
    %c0_i32 = arith.constant 0 : i32
    %c0_i32_0 = arith.constant 0 : i32
    %c0_i32_1 = arith.constant 0 : i32
    return %c0_i32, %c0_i32_0 : i32, i32
  }
  func.func @transform_4(%arg0: i32) -> (i32, i32) {
    %c0_i32 = arith.constant 0 : i32
    %c0_i32_0 = arith.constant 0 : i32
    %c0_i32_1 = arith.constant 0 : i32
    return %c0_i32, %c0_i32_0 : i32, i32
  }
  func.func @transform_5(%arg0: i32) -> (i32, i32) {
    %c0_i32 = arith.constant 0 : i32
    %c0_i32_0 = arith.constant 0 : i32
    %c0_i32_1 = arith.constant 0 : i32
    return %c0_i32, %c0_i32_0 : i32, i32
  }
  func.func @transform_6(%arg0: i32) -> (i32, i32) {
    %c0_i32 = arith.constant 0 : i32
    %c0_i32_0 = arith.constant 0 : i32
    %c0_i32_1 = arith.constant 0 : i32
    return %c0_i32, %c0_i32_0 : i32, i32
  }
  func.func @transform_7(%arg0: i32) -> (i32, i32) {
    %c0_i32 = arith.constant 0 : i32
    %c0_i32_0 = arith.constant 0 : i32
    %c0_i32_1 = arith.constant 0 : i32
    return %c0_i32, %c0_i32_0 : i32, i32
  }
  func.func @transform_8(%arg0: i32) -> (i32, i32) {
    %c0_i32 = arith.constant 0 : i32
    %c0_i32_0 = arith.constant 0 : i32
    %c0_i32_1 = arith.constant 0 : i32
    return %c0_i32, %c0_i32_0 : i32, i32
  }
  func.func @transform_9(%arg0: i32) -> (i32, i32) {
    %c0_i32 = arith.constant 0 : i32
    %c0_i32_0 = arith.constant 0 : i32
    return %arg0, %c0_i32 : i32, i32
  }
}

</mosaic_0001>

<llo_original>
// kernel: dqn_forward.1
$region0: #{dqn_forward.1}
  #allocation0 [shape = 'u32[]', space=smem, size = 0x4, offset = 0x4, fixed_abs, tag = 'smem constant byte address 0x4 - core index']
  #allocation1 [shape = 'u32[144,128]{1,0:T(1,128)}', space=vmem, size = 0x12000, scoped, tag = 'internal scratch']
  %s0 = inlined_call_operand.vmem [shape: bf16[8,8], index: 0, kind: input, shape index: {}]
  %s1 = inlined_call_operand.vmem [shape: bf16[8,128], index: 1, kind: input, shape index: {}]
  %s2 = inlined_call_operand.vmem [shape: f32[1,128], index: 2, kind: input, shape index: {}]
  %s3 = inlined_call_operand.vmem [shape: bf16[128,128], index: 3, kind: input, shape index: {}]
  %s4 = inlined_call_operand.vmem [shape: f32[1,128], index: 4, kind: input, shape index: {}]
  %s5 = inlined_call_operand.hbm [shape: bf16[128,128], index: 5, kind: input, shape index: {}]
  %s6 = inlined_call_operand.vmem [shape: f32[1,128], index: 6, kind: input, shape index: {}]
  %s7 = inlined_call_operand.vmem [shape: bf16[128,4], index: 7, kind: input, shape index: {}]
  %s8 = inlined_call_operand.vmem [shape: f32[1,4], index: 8, kind: input, shape index: {}]
  %s9 = inlined_call_operand.vmem [shape: f32[8,4], index: 9, kind: output, shape index: {}]
  %s10 = sld [smem:[#allocation0]]
  $region50: #{dqn_forward.1} parent=0
    _
  %s12 = ssub.s32 1, %s10
  %s13 = scalar_select 0, %s12, %s10
  $region1: #{dqn_forward.1} parent=0
    #allocation2 [shape = 'u8[32768]{0}', space=vmem, size = 0x8000, scoped, tag = 'input window, operand 5, single buffered']
    #allocation3 [shape = 's32[1]{0}', space=sflag, size = 0x4, scoped, tag = 'scoped memory for dqn_forward.1']
    %14 = vsyncpa [#allocation3], 0
    // Predicated region
    $region2: #{dqn_forward.1} parent=1 // pred_check
      _
    $region3: #{dqn_forward.1} parent=1 // pred_check_branch
      %16 = sbr.rel (0) target = $region5
    $region4: #{dqn_forward.1} parent=1 // pred_region
      _
    $region5: #{dqn_forward.1} parent=1 // pred_fallthru
      _
    // Predicated region
    $region6: #{dqn_forward.1} parent=1 // pred_check
      _
    $region7: #{dqn_forward.1} parent=1 // pred_check_branch
      %18 = sbr.rel (0) target = $region9
    $region8: #{dqn_forward.1} parent=1 // pred_region
      _
    $region9: #{dqn_forward.1} parent=1 // pred_fallthru
      _
    // Predicated region
    $region10: #{dqn_forward.1} parent=1 // pred_check
      _
    $region11: #{dqn_forward.1} parent=1 // pred_check_branch
      %20 = sbr.rel (0) target = $region13
    $region12: #{dqn_forward.1} parent=1 // pred_region
      _
    $region13: #{dqn_forward.1} parent=1 // pred_fallthru
      _
    // Predicated region
    $region14: #{dqn_forward.1} parent=1 // pred_check
      _
    $region15: #{dqn_forward.1} parent=1 // pred_check_branch
      %22 = sbr.rel (0) target = $region17
    $region16: #{dqn_forward.1} parent=1 // pred_region
      _
    $region17: #{dqn_forward.1} parent=1 // pred_fallthru
      _
    // Predicated region
    $region18: #{dqn_forward.1} parent=1 // pred_check
      _
    $region19: #{dqn_forward.1} parent=1 // pred_check_branch
      %24 = sbr.rel (0) target = $region21
    $region20: #{dqn_forward.1} parent=1 // pred_region
      _
    $region21: #{dqn_forward.1} parent=1 // pred_fallthru
      _
    // Predicated region
    $region22: #{dqn_forward.1} parent=1 // pred_check
      _
    $region23: #{dqn_forward.1} parent=1 // pred_check_branch
      %26 = sbr.rel (0) target = $region25
    $region24: #{dqn_forward.1} parent=1 // pred_region
      %s28 = ssub.s32 1024, 1024
      %29 = vsyncadd [#allocation3], %s28
      %s30 = sshll.u32 [#allocation2], 4
      %s31 = int_to_ptr.vmem [resolvable:$true] %s30
      %36 = dma.hbm_to_vmem [thread:$0]  %s5, 1024, %s31, [#allocation3], 64, 64, 4
    $region25: #{dqn_forward.1} parent=1 // pred_fallthru
      _
    // Predicated region
    $region26: #{dqn_forward.1} parent=1 // pred_check
      _
    $region27: #{dqn_forward.1} parent=1 // pred_check_branch
      %38 = sbr.rel (0) target = $region29
    $region28: #{dqn_forward.1} parent=1 // pred_region
      _
    $region29: #{dqn_forward.1} parent=1 // pred_fallthru
      _
    // Predicated region
    $region30: #{dqn_forward.1} parent=1 // pred_check
      _
    $region31: #{dqn_forward.1} parent=1 // pred_check_branch
      %40 = sbr.rel (0) target = $region33
    $region32: #{dqn_forward.1} parent=1 // pred_region
      _
    $region33: #{dqn_forward.1} parent=1 // pred_fallthru
      _
    // Predicated region
    $region34: #{dqn_forward.1} parent=1 // pred_check
      _
    $region35: #{dqn_forward.1} parent=1 // pred_check_branch
      %42 = sbr.rel (0) target = $region37
    $region36: #{dqn_forward.1} parent=1 // pred_region
      _
    $region37: #{dqn_forward.1} parent=1 // pred_fallthru
      _
    // Predicated region
    $region38: #{dqn_forward.1} parent=1 // pred_check
      _
    $region39: #{dqn_forward.1} parent=1 // pred_check_branch
      %44 = sbr.rel (0) target = $region41
    $region40: #{dqn_forward.1} parent=1 // pred_region
      %45 = dma.done [#allocation3], 1024
    $region41: #{dqn_forward.1} parent=1 // pred_fallthru
      _
    %v47 = vld [vmem:[%s0] sm:$0xf]
    %v48 = vld [vmem:[%s1] sm:$0xf]
    %v49 = vld [vmem:[%s2] sm:$0x1]
    %v51 = vlaneseq
    %v52 = vshrl.u32 %v51, 7
    %v53 = vsub.s32 0, %v52
    %v54 = vrot.slane %v49, %v53
    %vm56 = vcmask 64512
    %v58 = vsel %vm56, %v47, 0
    %vm60 = vcmask 1043456
    %v62 = vsel %vm60, %v48, 0
    %64 = vmatprep.subr.bf16.mxu0 0
    %65 = vmatpush1.bf16.msra.mxu0 %v62
    %66 = vmatprep.subr.bf16.mxu0 0
    %67 = vmatpush1.bf16.msra.mxu0 0
    %68 = vmatprep.subr.bf16.mxu0 0
    %69 = vmatpush1.bf16.msra.mxu0 0
    %70 = vmatprep.subr.bf16.mxu0 0
    %71 = vmatpush1.bf16.msra.mxu0 0
    %72 = vmatprep.subr.bf16.mxu0 0
    %73 = vmatpush1.bf16.msra.mxu0 0
    %74 = vmatprep.subr.bf16.mxu0 0
    %75 = vmatpush1.bf16.msra.mxu0 0
    %76 = vmatprep.subr.bf16.mxu0 0
    %77 = vmatpush1.bf16.msra.mxu0 0
    %78 = vmatprep.subr.bf16.mxu0 0
    %79 = vmatpush1.bf16.msra.mxu0 0
    %80 = vmatprep.subr.bf16.mxu0 0
    %81 = vmatpush1.bf16.msra.mxu0 0
    %82 = vmatprep.subr.bf16.mxu0 0
    %83 = vmatpush1.bf16.msra.mxu0 0
    %84 = vmatprep.subr.bf16.mxu0 0
    %85 = vmatpush1.bf16.msra.mxu0 0
    %86 = vmatprep.subr.bf16.mxu0 0
    %87 = vmatpush1.bf16.msra.mxu0 0
    %88 = vmatprep.subr.bf16.mxu0 0
    %89 = vmatpush1.bf16.msra.mxu0 0
    %90 = vmatprep.subr.bf16.mxu0 0
    %91 = vmatpush1.bf16.msra.mxu0 0
    %92 = vmatprep.subr.bf16.mxu0 0
    %93 = vmatpush1.bf16.msra.mxu0 0
    %94 = vmatprep.subr.bf16.mxu0 0
    %95 = vmatpush1.bf16.msra.mxu0 0
    %96 = vmatprep.mubr.bf16.mxu0 0
    %97 = vmatmul.mubr.bf16.gmra.mrb[0].mxu0 %v58
    %v98 = vpop.f32.mrb[0].mxu0
    %v99 = vadd.f32 %v54, %v98
    %v100 = vpop.f32.mrb[0].mxu0
    %v101 = vpop.f32.mrb[0].mxu0
    %v102 = vpop.f32.mrb[0].mxu0
    %103 = vdwg.mxu0
    %v104 = vmax.f32 %v99, 0.0
    %v105 = vpack.c.bf16 %v104, %v104
    %v106 = vld [vmem:[%s3] sm:$0xf]
    %v107 = vld [vmem:[%s3 + $0x4] sm:$0xf]
    %v108 = vld [vmem:[%s3 + $0x8] sm:$0xf]
    %v109 = vld [vmem:[%s3 + $0xc] sm:$0xf]
    %v110 = vld [vmem:[%s3 + $0x10] sm:$0xf]
    %v111 = vld [vmem:[%s3 + $0x14] sm:$0xf]
    %v112 = vld [vmem:[%s3 + $0x18] sm:$0xf]
    %v113 = vld [vmem:[%s3 + $0x1c] sm:$0xf]
    %v114 = vld [vmem:[%s3 + $0x20] sm:$0xf]
    %v115 = vld [vmem:[%s3 + $0x24] sm:$0xf]
    %v116 = vld [vmem:[%s3 + $0x28] sm:$0xf]
    %v117 = vld [vmem:[%s3 + $0x2c] sm:$0xf]
    %v118 = vld [vmem:[%s3 + $0x30] sm:$0xf]
    %v119 = vld [vmem:[%s3 + $0x34] sm:$0xf]
    %v120 = vld [vmem:[%s3 + $0x38] sm:$0xf]
    %v121 = vld [vmem:[%s3 + $0x3c] sm:$0xf]
    %v122 = vld [vmem:[%s4] sm:$0x1]
    %v124 = vlaneseq
    %v125 = vshrl.u32 %v124, 7
    %v126 = vsub.s32 0, %v125
    %v127 = vrot.slane %v122, %v126
    %v145 = vunpack.c.l.b16 %v106
    %v146 = vunpack.c.l.b16 %v107
    %v147 = vunpack.c.l.b16 %v108
    %v148 = vunpack.c.l.b16 %v109
    %v149 = vunpack.c.l.b16 %v110
    %v150 = vunpack.c.l.b16 %v111
    %v151 = vunpack.c.l.b16 %v112
    %v152 = vunpack.c.l.b16 %v113
    %v153 = vunpack.c.l.b16 %v114
    %v154 = vunpack.c.l.b16 %v115
    %v155 = vunpack.c.l.b16 %v116
    %v156 = vunpack.c.l.b16 %v117
    %v157 = vunpack.c.l.b16 %v118
    %v158 = vunpack.c.l.b16 %v119
    %v159 = vunpack.c.l.b16 %v120
    %v160 = vunpack.c.l.b16 %v121
    %v161 = vpack.c.b16 %v146, %v145
    %v162 = vpack.c.b16 %v148, %v147
    %v163 = vpack.c.b16 %v150, %v149
    %v164 = vpack.c.b16 %v152, %v151
    %v165 = vpack.c.b16 %v154, %v153
    %v166 = vpack.c.b16 %v156, %v155
    %v167 = vpack.c.b16 %v158, %v157
    %v168 = vpack.c.b16 %v160, %v159
    %177 = vmatprep.subr.bf16.mxu0 0
    %178 = vmatpush1.bf16.msra.mxu0 %v161
    %179 = vmatprep.subr.bf16.mxu0 0
    %180 = vmatpush1.bf16.msra.mxu0 %v162
    %181 = vmatprep.subr.bf16.mxu0 0
    %182 = vmatpush1.bf16.msra.mxu0 %v163
    %183 = vmatprep.subr.bf16.mxu0 0
    %184 = vmatpush1.bf16.msra.mxu0 %v164
    %185 = vmatprep.subr.bf16.mxu0 0
    %186 = vmatpush1.bf16.msra.mxu0 %v165
    %187 = vmatprep.subr.bf16.mxu0 0
    %188 = vmatpush1.bf16.msra.mxu0 %v166
    %189 = vmatprep.subr.bf16.mxu0 0
    %190 = vmatpush1.bf16.msra.mxu0 %v167
    %191 = vmatprep.subr.bf16.mxu0 0
    %192 = vmatpush1.bf16.msra.mxu0 %v168
    %193 = vmatprep.subr.bf16.mxu0 0
    %194 = vmatpush1.bf16.msra.mxu0 0
    %195 = vmatprep.subr.bf16.mxu0 0
    %196 = vmatpush1.bf16.msra.mxu0 0
    %197 = vmatprep.subr.bf16.mxu0 0
    %198 = vmatpush1.bf16.msra.mxu0 0
    %199 = vmatprep.subr.bf16.mxu0 0
    %200 = vmatpush1.bf16.msra.mxu0 0
    %201 = vmatprep.subr.bf16.mxu0 0
    %202 = vmatpush1.bf16.msra.mxu0 0
    %203 = vmatprep.subr.bf16.mxu0 0
    %204 = vmatpush1.bf16.msra.mxu0 0
    %205 = vmatprep.subr.bf16.mxu0 0
    %206 = vmatpush1.bf16.msra.mxu0 0
    %207 = vmatprep.subr.bf16.mxu0 0
    %208 = vmatpush1.bf16.msra.mxu0 0
    %209 = vmatprep.mubr.bf16.mxu0 0
    %210 = vmatmul.mubr.bf16.gmra.mrb[0].mxu0 %v105
    %v211 = vpop.f32.mrb[0].mxu0
    %v212 = vadd.f32 %v127, %v211
    %v213 = vpop.f32.mrb[0].mxu0
    %v214 = vpop.f32.mrb[0].mxu0
    %v215 = vpop.f32.mrb[0].mxu0
    %216 = vdwg.mxu0
    %v217 = vmax.f32 %v212, 0.0
    %v218 = vpack.c.bf16 %v217, %v217
    %v219 = vld [vmem:[#allocation2] sm:$0xf]
    %v220 = vld [vmem:[#allocation2 + $0x4] sm:$0xf]
    %v221 = vld [vmem:[#allocation2 + $0x8] sm:$0xf]
    %v222 = vld [vmem:[#allocation2 + $0xc] sm:$0xf]
    %v223 = vld [vmem:[#allocation2 + $0x10] sm:$0xf]
    %v224 = vld [vmem:[#allocation2 + $0x14] sm:$0xf]
    %v225 = vld [vmem:[#allocation2 + $0x18] sm:$0xf]
    %v226 = vld [vmem:[#allocation2 + $0x1c] sm:$0xf]
    %v227 = vld [vmem:[#allocation2 + $0x20] sm:$0xf]
    %v228 = vld [vmem:[#allocation2 + $0x24] sm:$0xf]
    %v229 = vld [vmem:[#allocation2 + $0x28] sm:$0xf]
    %v230 = vld [vmem:[#allocation2 + $0x2c] sm:$0xf]
    %v231 = vld [vmem:[#allocation2 + $0x30] sm:$0xf]
    %v232 = vld [vmem:[#allocation2 + $0x34] sm:$0xf]
    %v233 = vld [vmem:[#allocation2 + $0x38] sm:$0xf]
    %v234 = vld [vmem:[#allocation2 + $0x3c] sm:$0xf]
    %v235 = vld [vmem:[%s6] sm:$0x1]
    %v237 = vlaneseq
    %v238 = vshrl.u32 %v237, 7
    %v239 = vsub.s32 0, %v238
    %v240 = vrot.slane %v235, %v239
    %v258 = vunpack.c.l.b16 %v219
    %v259 = vunpack.c.l.b16 %v220
    %v260 = vunpack.c.l.b16 %v221
    %v261 = vunpack.c.l.b16 %v222
    %v262 = vunpack.c.l.b16 %v223
    %v263 = vunpack.c.l.b16 %v224
    %v264 = vunpack.c.l.b16 %v225
    %v265 = vunpack.c.l.b16 %v226
    %v266 = vunpack.c.l.b16 %v227
    %v267 = vunpack.c.l.b16 %v228
    %v268 = vunpack.c.l.b16 %v229
    %v269 = vunpack.c.l.b16 %v230
    %v270 = vunpack.c.l.b16 %v231
    %v271 = vunpack.c.l.b16 %v232
    %v272 = vunpack.c.l.b16 %v233
    %v273 = vunpack.c.l.b16 %v234
    %v274 = vpack.c.b16 %v259, %v258
    %v275 = vpack.c.b16 %v261, %v260
    %v276 = vpack.c.b16 %v263, %v262
    %v277 = vpack.c.b16 %v265, %v264
    %v278 = vpack.c.b16 %v267, %v266
    %v279 = vpack.c.b16 %v269, %v268
    %v280 = vpack.c.b16 %v271, %v270
    %v281 = vpack.c.b16 %v273, %v272
    %290 = vmatprep.subr.bf16.mxu0 0
    %291 = vmatpush1.bf16.msra.mxu0 %v274
    %292 = vmatprep.subr.bf16.mxu0 0
    %293 = vmatpush1.bf16.msra.mxu0 %v275
    %294 = vmatprep.subr.bf16.mxu0 0
    %295 = vmatpush1.bf16.msra.mxu0 %v276
    %296 = vmatprep.subr.bf16.mxu0 0
    %297 = vmatpush1.bf16.msra.mxu0 %v277
    %298 = vmatprep.subr.bf16.mxu0 0
    %299 = vmatpush1.bf16.msra.mxu0 %v278
    %300 = vmatprep.subr.bf16.mxu0 0
    %301 = vmatpush1.bf16.msra.mxu0 %v279
    %302 = vmatprep.subr.bf16.mxu0 0
    %303 = vmatpush1.bf16.msra.mxu0 %v280
    %304 = vmatprep.subr.bf16.mxu0 0
    %305 = vmatpush1.bf16.msra.mxu0 %v281
    %306 = vmatprep.subr.bf16.mxu0 0
    %307 = vmatpush1.bf16.msra.mxu0 0
    %308 = vmatprep.subr.bf16.mxu0 0
    %309 = vmatpush1.bf16.msra.mxu0 0
    %310 = vmatprep.subr.bf16.mxu0 0
    %311 = vmatpush1.bf16.msra.mxu0 0
    %312 = vmatprep.subr.bf16.mxu0 0
    %313 = vmatpush1.bf16.msra.mxu0 0
    %314 = vmatprep.subr.bf16.mxu0 0
    %315 = vmatpush1.bf16.msra.mxu0 0
    %316 = vmatprep.subr.bf16.mxu0 0
    %317 = vmatpush1.bf16.msra.mxu0 0
    %318 = vmatprep.subr.bf16.mxu0 0
    %319 = vmatpush1.bf16.msra.mxu0 0
    %320 = vmatprep.subr.bf16.mxu0 0
    %321 = vmatpush1.bf16.msra.mxu0 0
    %322 = vmatprep.mubr.bf16.mxu0 0
    %323 = vmatmul.mubr.bf16.gmra.mrb[0].mxu0 %v218
    %v324 = vpop.f32.mrb[0].mxu0
    %v325 = vadd.f32 %v240, %v324
    %v326 = vpop.f32.mrb[0].mxu0
    %v327 = vpop.f32.mrb[0].mxu0
    %v328 = vpop.f32.mrb[0].mxu0
    %329 = vdwg.mxu0
    %v330 = vmax.f32 %v325, 0.0
    %v331 = vpack.c.bf16 %v330, %v330
    %v332 = vld [vmem:[%s7] sm:$0xf]
    %v333 = vld [vmem:[%s7 + $0x4] sm:$0xf]
    %v334 = vld [vmem:[%s7 + $0x8] sm:$0xf]
    %v335 = vld [vmem:[%s7 + $0xc] sm:$0xf]
    %v336 = vld [vmem:[%s7 + $0x10] sm:$0xf]
    %v337 = vld [vmem:[%s7 + $0x14] sm:$0xf]
    %v338 = vld [vmem:[%s7 + $0x18] sm:$0xf]
    %v339 = vld [vmem:[%s7 + $0x1c] sm:$0xf]
    %v340 = vld [vmem:[%s7 + $0x20] sm:$0xf]
    %v341 = vld [vmem:[%s7 + $0x24] sm:$0xf]
    %v342 = vld [vmem:[%s7 + $0x28] sm:$0xf]
    %v343 = vld [vmem:[%s7 + $0x2c] sm:$0xf]
    %v344 = vld [vmem:[%s7 + $0x30] sm:$0xf]
    %v345 = vld [vmem:[%s7 + $0x34] sm:$0xf]
    %v346 = vld [vmem:[%s7 + $0x38] sm:$0xf]
    %v347 = vld [vmem:[%s7 + $0x3c] sm:$0xf]
    %v348 = vld [vmem:[%s8] sm:$0x1]
    %v350 = vlaneseq
    %v351 = vshrl.u32 %v350, 7
    %v352 = vsub.s32 0, %v351
    %v353 = vrot.slane %v348, %v352
    %v371 = vunpack.c.l.b16 %v332
    %v372 = vunpack.c.l.b16 %v333
    %v373 = vunpack.c.l.b16 %v334
    %v374 = vunpack.c.l.b16 %v335
    %v375 = vunpack.c.l.b16 %v336
    %v376 = vunpack.c.l.b16 %v337
    %v377 = vunpack.c.l.b16 %v338
    %v378 = vunpack.c.l.b16 %v339
    %v379 = vunpack.c.l.b16 %v340
    %v380 = vunpack.c.l.b16 %v341
    %v381 = vunpack.c.l.b16 %v342
    %v382 = vunpack.c.l.b16 %v343
    %v383 = vunpack.c.l.b16 %v344
    %v384 = vunpack.c.l.b16 %v345
    %v385 = vunpack.c.l.b16 %v346
    %v386 = vunpack.c.l.b16 %v347
    %v387 = vpack.c.b16 %v372, %v371
    %v388 = vpack.c.b16 %v374, %v373
    %v389 = vpack.c.b16 %v376, %v375
    %v390 = vpack.c.b16 %v378, %v377
    %v391 = vpack.c.b16 %v380, %v379
    %v392 = vpack.c.b16 %v382, %v381
    %v393 = vpack.c.b16 %v384, %v383
    %v394 = vpack.c.b16 %v386, %v385
    %403 = vmatprep.subr.bf16.mxu0 0
    %404 = vmatpush1.bf16.msra.mxu0 %v387
    %405 = vmatprep.subr.bf16.mxu0 0
    %406 = vmatpush1.bf16.msra.mxu0 %v388
    %407 = vmatprep.subr.bf16.mxu0 0
    %408 = vmatpush1.bf16.msra.mxu0 %v389
    %409 = vmatprep.subr.bf16.mxu0 0
    %410 = vmatpush1.bf16.msra.mxu0 %v390
    %411 = vmatprep.subr.bf16.mxu0 0
    %412 = vmatpush1.bf16.msra.mxu0 %v391
    %413 = vmatprep.subr.bf16.mxu0 0
    %414 = vmatpush1.bf16.msra.mxu0 %v392
    %415 = vmatprep.subr.bf16.mxu0 0
    %416 = vmatpush1.bf16.msra.mxu0 %v393
    %417 = vmatprep.subr.bf16.mxu0 0
    %418 = vmatpush1.bf16.msra.mxu0 %v394
    %419 = vmatprep.subr.bf16.mxu0 0
    %420 = vmatpush1.bf16.msra.mxu0 0
    %421 = vmatprep.subr.bf16.mxu0 0
    %422 = vmatpush1.bf16.msra.mxu0 0
    %423 = vmatprep.subr.bf16.mxu0 0
    %424 = vmatpush1.bf16.msra.mxu0 0
    %425 = vmatprep.subr.bf16.mxu0 0
    %426 = vmatpush1.bf16.msra.mxu0 0
    %427 = vmatprep.subr.bf16.mxu0 0
    %428 = vmatpush1.bf16.msra.mxu0 0
    %429 = vmatprep.subr.bf16.mxu0 0
    %430 = vmatpush1.bf16.msra.mxu0 0
    %431 = vmatprep.subr.bf16.mxu0 0
    %432 = vmatpush1.bf16.msra.mxu0 0
    %433 = vmatprep.subr.bf16.mxu0 0
    %434 = vmatpush1.bf16.msra.mxu0 0
    %435 = vmatprep.mubr.bf16.mxu0 0
    %436 = vmatmul.mubr.bf16.gmra.mrb[0].mxu0 %v331
    %v437 = vpop.f32.mrb[0].mxu0
    %v438 = vadd.f32 %v353, %v437
    %v439 = vpop.f32.mrb[0].mxu0
    %v440 = vpop.f32.mrb[0].mxu0
    %v441 = vpop.f32.mrb[0].mxu0
    %442 = vdwg.mxu0
    %vm443 = vcmask 31744
    %444 = vst.msk [vmem:[%s9] sm:$0xff] %vm443, %v438
    // Predicated region
    $region42: #{dqn_forward.1} parent=1 // pred_check
      _
    $region43: #{dqn_forward.1} parent=1 // pred_check_branch
      %446 = sbr.rel (0) target = $region45
    $region44: #{dqn_forward.1} parent=1 // pred_region
      _
    $region45: #{dqn_forward.1} parent=1 // pred_fallthru
      _
    // Predicated region
    $region46: #{dqn_forward.1} parent=1 // pred_check
      _
    $region47: #{dqn_forward.1} parent=1 // pred_check_branch
      %448 = sbr.rel (0) target = $region49
    $region48: #{dqn_forward.1} parent=1 // pred_region
      _
    $region49: #{dqn_forward.1} parent=1 // pred_fallthru
      _
    %449 = vsyncpa [#allocation3], 1

</llo_original>
